<compile_context>
chip_gen: v5e
topology: v5e:2x2
jax: 0.10.0
libtpu: 0.0.40
codegen_flags: <defaults>
</compile_context>

<pallas_src>
import numpy as np
import jax
import jax.numpy as jnp
from jax.experimental import pallas as pl
from jax.experimental.pallas import tpu as pltpu


def create_sinusoidal_embeddings(n_pos: int, dim: int) -> np.ndarray:
    """NumPy port of the PyTorch helper (deterministic)."""
    position_enc = np.array(
        [[pos / np.power(10000, 2 * (j // 2) / dim) for j in range(dim)]
         for pos in range(n_pos)], dtype=np.float64)
    out = np.zeros((n_pos, dim), dtype=np.float32)
    out[:, 0::2] = np.sin(position_enc[:, 0::2])
    out[:, 1::2] = np.cos(position_enc[:, 1::2])
    return out


def _embeddings_kernel(x_ref, add_ref, gamma_ref, beta_ref, o_ref):
    # x_ref / o_ref: (TS, D)   (batch dim squeezed away)
    # add_ref:       (TS, D)   fused (pos + modality) table slice
    # gamma_ref / beta_ref: (1, D), f32
    x = x_ref[...]
    if x.dtype != jnp.float32:            # static (trace-time) dtype check
        x = x.astype(jnp.float32)
    add = add_ref[...]
    if add.dtype != jnp.float32:
        add = add.astype(jnp.float32)
    h = x + add

    # Two-pass LayerNorm over the last dim, eps=1e-12, biased variance
    # (matches torch.nn.LayerNorm); unfolded affine application.
    mean = jnp.mean(h, axis=-1, keepdims=True)               # (TS, 1)
    hc = h - mean
    var = jnp.mean(hc * hc, axis=-1, keepdims=True)           # (TS, 1)
    inv = jax.lax.rsqrt(var + 1e-12)                           # EUP
    o_ref[...] = ((hc * inv) * gamma_ref[...] + beta_ref[...]).astype(o_ref.dtype)


def _choose_seq_tile(S: int, D: int, out_dtype,
                     target_bytes: int = 4 << 20) -> int:
    """Seq-tile rows: min(S, budget) rounded down to the sublane pack multiple.

    The grid uses pl.cdiv, so TS need not divide S — Pallas masks the ragged
    last tile (row-wise LayerNorm keeps padded rows independent of valid ones).
    """
    itemsize = jnp.dtype(out_dtype).itemsize
    pack = max(1, 4 // itemsize)          # sublane pack: 1 f32, 2 bf16, 4 int8
    align = 8 * pack
    max_rows = target_bytes // max(1, D * 4)   # f32 working-slab budget
    max_rows = max(align, (max_rows // align) * align)
    if S <= max_rows:
        return S                          # full-S block: always layout-legal
    return max_rows


def _vmem_limit_bytes() -> int:
    """32 MiB everywhere (safe on v7x's 64 MiB/TC); 64 MiB on v5e/v6e."""
    try:
        kind = jax.devices()[0].device_kind.lower()
    except Exception:
        kind = ""
    if ("v5" in kind) or ("v6" in kind):
        return 64 * 1024 * 1024
    return 32 * 1024 * 1024


def embeddings_forward(x, pos_emb_table, mod_emb_table, gamma, beta,
                       language_len, vision_len):
    """x: (B, S, D) with S == language_len + vision_len."""
    B, S, D = x.shape
    assert S == language_len + vision_len

    # --- glue (pure indexing + one tiny add, done once per call in XLA) ---
    pos = pos_emb_table[:S, :]                                     # (S, D)
    modality_ids = jnp.concatenate(
        [jnp.zeros((language_len,), jnp.int32),
         jnp.ones((vision_len,), jnp.int32)])
    mod = mod_emb_table[modality_ids, :]                           # (S, D)
    # Keep the fused table in bf16 when x is bf16 (half the HBM/VMEM traffic),
    # else f32; it is upcast inside the kernel.
    table_dtype = jnp.bfloat16 if x.dtype == jnp.bfloat16 else jnp.float32
    add_table = (pos.astype(jnp.float32)
                 + mod.astype(jnp.float32)).astype(table_dtype)    # (S, D)
    gamma2 = gamma.reshape(1, D).astype(jnp.float32)
    beta2 = beta.reshape(1, D).astype(jnp.float32)

    ts = _choose_seq_tile(S, D, x.dtype)
    num_seq_tiles = pl.cdiv(S, ts)
    # Batch is the INNERMOST grid axis -> the add_table block index is constant
    # across it, so Pallas fetches each table tile from HBM exactly once.
    grid = (num_seq_tiles, B)

    x_itemsize = jnp.dtype(x.dtype).itemsize
    t_itemsize = jnp.dtype(table_dtype).itemsize
    cost = pl.CostEstimate(
        flops=9 * B * S * D,
        transcendentals=B * S,                      # one rsqrt per row
        bytes_accessed=(2 * B * S * D * x_itemsize   # x read + out write
                        + S * D * t_itemsize         # table: once per seq-tile
                        + 2 * D * 4),                # gamma, beta
    )

    return pl.pallas_call(
        _embeddings_kernel,
        out_shape=jax.ShapeDtypeStruct((B, S, D), x.dtype),
        grid_spec=pltpu.PrefetchScalarGridSpec(
            num_scalar_prefetch=0,
            grid=grid,
            in_specs=[
                pl.BlockSpec((pl.Squeezed(), ts, D), lambda s, b: (b, s, 0)),
                pl.BlockSpec((ts, D), lambda s, b: (s, 0)),
                pl.BlockSpec((1, D), lambda s, b: (0, 0)),
                pl.BlockSpec((1, D), lambda s, b: (0, 0)),
            ],
            out_specs=pl.BlockSpec((pl.Squeezed(), ts, D),
                                   lambda s, b: (b, s, 0)),
        ),
        compiler_params=pltpu.CompilerParams(
            dimension_semantics=("parallel", "parallel"),
            vmem_limit_bytes=_vmem_limit_bytes(),
        ),
        cost_estimate=cost,
    )(x, add_table, gamma2, beta2)


if __name__ == "__main__":
    # Module hyper-params (small; D=128 keeps the last dim lane-dense).
    d_model = 128
    language_len = 8
    vision_len = 8
    seq_len = language_len + vision_len      # forward requires S = lang + vis
    batch = 2

    key = jax.random.PRNGKey(0)
    k_x, k_mod = jax.random.split(key)

    # Parameters (deterministic, built in-script).
    pos_emb_table = jnp.asarray(
        create_sinusoidal_embeddings(seq_len, d_model))            # (S, D)
    mod_emb_table = jax.random.normal(k_mod, (2, d_model), jnp.float32)
    gamma = jnp.ones((d_model,), jnp.float32)                      # LN weight
    beta = jnp.zeros((d_model,), jnp.float32)                      # LN bias

    # Example input.
    x = jax.random.normal(k_x, (batch, seq_len, d_model), jnp.float32)

    out = embeddings_forward(x, pos_emb_table, mod_emb_table, gamma, beta,
                             language_len, vision_len)
    out = jax.block_until_ready(out)

    # Pure-JAX reference check (two-pass LayerNorm, same semantics).
    modality_ids = jnp.concatenate(
        [jnp.zeros((language_len,), jnp.int32),
         jnp.ones((vision_len,), jnp.int32)])
    h = x + pos_emb_table[None, :seq_len, :] + mod_emb_table[modality_ids][None]
    mean = jnp.mean(h, axis=-1, keepdims=True)
    var = jnp.mean((h - mean) ** 2, axis=-1, keepdims=True)
    ref = (h - mean) * jax.lax.rsqrt(var + 1e-12) * gamma + beta

    np.testing.assert_allclose(np.asarray(out), np.asarray(ref),
                               rtol=1e-5, atol=1e-5)
    print("KERNEL_OK")
</pallas_src>

<mosaic_0001>
module attributes {stable_mosaic.version = 11 : i64} {
  func.func @_embeddings_kernel(%arg0: i32, %arg1: i32, %arg2: memref<1x16x128xf32, #tpu.memory_space<vmem>>, %arg3: memref<16x128xf32, #tpu.memory_space<vmem>>, %arg4: memref<1x128xf32, #tpu.memory_space<vmem>>, %arg5: memref<1x128xf32, #tpu.memory_space<vmem>>, %arg6: memref<1x16x128xf32, #tpu.memory_space<vmem>>) attributes {dimension_semantics = [#tpu.dimension_semantics<parallel>, #tpu.dimension_semantics<parallel>], iteration_bounds = array<i64: 1, 2>, scalar_prefetch = 0 : i64, scratch_operands = 0 : i64, tpu.core_type = #tpu.core_type<tc>, window_params = [{transform_indices = @transform_0, window_bounds = array<i64: 1, 16, 128>}, {transform_indices = @transform_1, window_bounds = array<i64: 16, 128>}, {pipeline_mode = #tpu.pipeline_mode<synchronous>, transform_indices = @transform_2, window_bounds = array<i64: 1, 128>}, {pipeline_mode = #tpu.pipeline_mode<synchronous>, transform_indices = @transform_3, window_bounds = array<i64: 1, 128>}, {transform_indices = @transform_4, window_bounds = array<i64: 1, 16, 128>}]} {
    %c0 = arith.constant 0 : index
    %c0_0 = arith.constant 0 : index
    %c0_1 = arith.constant 0 : index
    %0 = vector.load %arg2[%c0, %c0_0, %c0_1] : memref<1x16x128xf32, #tpu.memory_space<vmem>>, vector<1x16x128xf32>
    %1 = vector.shape_cast %0 : vector<1x16x128xf32> to vector<16x128xf32>
    %c0_2 = arith.constant 0 : index
    %c0_3 = arith.constant 0 : index
    %2 = vector.load %arg3[%c0_2, %c0_3] : memref<16x128xf32, #tpu.memory_space<vmem>>, vector<16x128xf32>
    %3 = arith.addf %1, %2 : vector<16x128xf32>
    %cst = arith.constant dense<0.000000e+00> : vector<16xf32>
    %4 = vector.multi_reduction <add>, %3, %cst [1] : vector<16x128xf32> to vector<16xf32>
    %5 = vector.shape_cast %4 : vector<16xf32> to vector<16x1xf32>
    %cst_4 = arith.constant 1.280000e+02 : f32
    %6 = vector.broadcast %cst_4 : f32 to vector<16x1xf32>
    %7 = arith.divf %5, %6 : vector<16x1xf32>
    %8 = vector.broadcast %7 : vector<16x1xf32> to vector<16x128xf32>
    %9 = arith.subf %3, %8 : vector<16x128xf32>
    %10 = arith.mulf %9, %9 : vector<16x128xf32>
    %cst_5 = arith.constant dense<0.000000e+00> : vector<16xf32>
    %11 = vector.multi_reduction <add>, %10, %cst_5 [1] : vector<16x128xf32> to vector<16xf32>
    %12 = vector.shape_cast %11 : vector<16xf32> to vector<16x1xf32>
    %cst_6 = arith.constant 1.280000e+02 : f32
    %13 = vector.broadcast %cst_6 : f32 to vector<16x1xf32>
    %14 = arith.divf %12, %13 : vector<16x1xf32>
    %cst_7 = arith.constant 9.99999996E-13 : f32
    %15 = vector.broadcast %cst_7 : f32 to vector<16x1xf32>
    %16 = arith.addf %14, %15 : vector<16x1xf32>
    %17 = math.rsqrt %16 : vector<16x1xf32>
    %18 = vector.broadcast %17 : vector<16x1xf32> to vector<16x128xf32>
    %19 = arith.mulf %9, %18 : vector<16x128xf32>
    %c0_8 = arith.constant 0 : index
    %c0_9 = arith.constant 0 : index
    %20 = vector.load %arg4[%c0_8, %c0_9] : memref<1x128xf32, #tpu.memory_space<vmem>>, vector<1x128xf32>
    %21 = vector.broadcast %20 : vector<1x128xf32> to vector<16x128xf32>
    %22 = arith.mulf %19, %21 : vector<16x128xf32>
    %c0_10 = arith.constant 0 : index
    %c0_11 = arith.constant 0 : index
    %23 = vector.load %arg5[%c0_10, %c0_11] : memref<1x128xf32, #tpu.memory_space<vmem>>, vector<1x128xf32>
    %24 = vector.broadcast %23 : vector<1x128xf32> to vector<16x128xf32>
    %25 = arith.addf %22, %24 : vector<16x128xf32>
    %c0_12 = arith.constant 0 : index
    %c0_13 = arith.constant 0 : index
    %c0_14 = arith.constant 0 : index
    %26 = vector.load %arg6[%c0_12, %c0_13, %c0_14] : memref<1x16x128xf32, #tpu.memory_space<vmem>>, vector<1x16x128xf32>
    %27 = vector.shape_cast %26 : vector<1x16x128xf32> to vector<16x128xf32>
    %28 = vector.shape_cast %25 : vector<16x128xf32> to vector<1x16x128xf32>
    tpu.vector_store %arg6[%c0_12, %c0_13, %c0_14], %28 {strides = array<i32>} : memref<1x16x128xf32, #tpu.memory_space<vmem>>, vector<1x16x128xf32>,
    return
  }
  func.func @transform_0(%arg0: i32, %arg1: i32) -> (i32, i32, i32) {
    %c0_i32 = arith.constant 0 : i32
    %c0_i32_0 = arith.constant 0 : i32
    return %arg1, %arg0, %c0_i32 : i32, i32, i32
  }
  func.func @transform_1(%arg0: i32, %arg1: i32) -> (i32, i32) {
    %c0_i32 = arith.constant 0 : i32
    %c0_i32_0 = arith.constant 0 : i32
    return %arg0, %c0_i32 : i32, i32
  }
  func.func @transform_2(%arg0: i32, %arg1: i32) -> (i32, i32) {
    %c0_i32 = arith.constant 0 : i32
    %c0_i32_0 = arith.constant 0 : i32
    %c0_i32_1 = arith.constant 0 : i32
    return %c0_i32, %c0_i32_0 : i32, i32
  }
  func.func @transform_3(%arg0: i32, %arg1: i32) -> (i32, i32) {
    %c0_i32 = arith.constant 0 : i32
    %c0_i32_0 = arith.constant 0 : i32
    %c0_i32_1 = arith.constant 0 : i32
    return %c0_i32, %c0_i32_0 : i32, i32
  }
  func.func @transform_4(%arg0: i32, %arg1: i32) -> (i32, i32, i32) {
    %c0_i32 = arith.constant 0 : i32
    %c0_i32_0 = arith.constant 0 : i32
    return %arg1, %arg0, %c0_i32 : i32, i32, i32
  }
}

</mosaic_0001>

<llo_original>
// kernel: tpu_custom_call.1
$region0: #{tpu_custom_call.1}
  #allocation0 [shape = 'u32[]', space=smem, size = 0x4, offset = 0x4, fixed_abs, tag = 'smem constant byte address 0x4 - core index']
  #allocation1 [shape = 'u32[72,128]{1,0:T(1,128)}', space=vmem, size = 0x9000, scoped, tag = 'internal scratch']
  %s0 = inlined_call_operand.hbm [shape: f32[2,16,128], index: 0, kind: input, shape index: {}]
  %s1 = inlined_call_operand.hbm [shape: f32[16,128], index: 1, kind: input, shape index: {}]
  %s2 = inlined_call_operand.vmem [shape: f32[1,128], index: 2, kind: input, shape index: {}]
  %s3 = inlined_call_operand.vmem [shape: f32[1,128], index: 3, kind: input, shape index: {}]
  %s4 = inlined_call_operand.hbm [shape: f32[2,16,128], index: 4, kind: output, shape index: {}]
  %s5 = sld [smem:[#allocation0]]
  $region57: #{tpu_custom_call.1} parent=0
    _
  %s7 = ssub.s32 1, %s5
  %s8 = scalar_select 0, %s7, %s5
  $region1: #{tpu_custom_call.1} parent=0
    #allocation2 [shape = 'u8[16384]{0}', space=vmem, size = 0x4000, scoped, tag = 'input window, operand 0']
    #allocation3 [shape = 's32[2]{0}', space=sflag, size = 0x8, scoped, tag = 'scoped memory for tpu_custom_call.1']
    #allocation4 [shape = 's32[2]{0}', space=sflag, size = 0x8, scoped, tag = 'scoped memory for tpu_custom_call.1']
    #allocation5 [shape = 'u8[8192]{0}', space=vmem, size = 0x2000, scoped, tag = 'input window, operand 1, single buffered']
    #allocation6 [shape = 's32[1]{0}', space=sflag, size = 0x4, scoped, tag = 'scoped memory for tpu_custom_call.1']
    #allocation7 [shape = 'u8[16384]{0}', space=vmem, size = 0x4000, scoped, tag = 'output window, operand 0']
    %9 = vsyncpa [#allocation3], 0
    %s10 = scalar_lea.sflag [#allocation3], 1
    %11 = vsyncpa %s10, 0
    %12 = vsyncpa [#allocation6], 0
    %13 = vsyncpa [#allocation4], 0
    %s14 = scalar_lea.sflag [#allocation4], 1
    %15 = vsyncpa %s14, 0
    loop: start=0, step=1, limit=4
    $region2: #{tpu_custom_call.1} parent=1 // loop_pre_header
      _
    $region3: #{tpu_custom_call.1} parent=1 // loop_header
      %s17 = sphi 0, %s21
      %p18 = scmp.ge.s32.totalorder %s17, 4
      %s24 = sphi 0, %s36
      %s25 = sphi 0, %s32
      %s26 = sphi 0, %s24
      %s27 = sphi 0, %s25
      %s28 = sphi 0, %s26
      %s29 = sphi 0, %s27
      %s41 = sphi 0, %s43
      %s44 = sphi 0, %s41
      %s45 = sphi 0, %s44
      %s61 = sphi 0, %s45
      %s67 = sphi 0, %s69
      %s70 = sphi 0, %s67
      %s71 = sphi 0, %s70
      %s87 = sphi 0, %s71
      %s91 = sphi 0, %s91
      %s93 = sphi 0, %s91
      %s94 = sphi 0, %s93
      %s108 = sphi 0, %s94
      %s112 = sphi 0, %s112
      %s114 = sphi 0, %s112
      %s115 = sphi 0, %s114
      %s129 = sphi 0, %s115
      %s137 = sphi 0, %s139
      %s140 = sphi 0, %s137
      %s141 = sphi 0, %s140
      %s157 = sphi 0, %s141
    $region4: #{tpu_custom_call.1} parent=1 // loop_header_branch
      %20 = sbr.rel (%p18) target = $region8
    $region5: #{tpu_custom_call.1} parent=1 // loop_body
      %s22 = ssub.s32 %s17, 1
      %s23 = ssub.s32 %s17, 2
      %s30 = sadd.s32 1, %s25
      %p31 = scmp.ge.s32.totalorder %s30, 2
      %s32 = scalar_select %p31, 0, %s30
      %s33 = sadd.s32 1, %s24
      %s34 = scalar_select %p31, %s33, %s24
      %p35 = scmp.ge.s32.totalorder %s34, 1
      %s36 = scalar_select %p35, 0, %s34
      %s37 = ssub.s32 %s25, %s32
      %s38 = ssub.s32 %s24, %s36
      %s39 = sor.u32 %s37, %s38
      %p40 = scmp.eq.s32.totalorder %s39, 0
      %s42 = sadd.s32 %s41, 1
      %s43 = scalar_select %p40, %s41, %s42
      %p46 = pneg %p40
      %p47 = scmp.eq.s32.totalorder %s17, 1
      %p48 = por %p46, %p47
      %p49 = scmp.ne.s32.totalorder %s41, %s44
      %p50 = scmp.eq.s32.totalorder %s17, 0
      %p51 = por %p49, %p50
      %p52 = scmp.ne.s32.totalorder %s41, %s44
      %p53 = scmp.eq.s32.totalorder %s22, 1
      %p54 = por %p52, %p53
      %p55 = scmp.ne.s32.totalorder %s44, %s45
      %p56 = scmp.eq.s32.totalorder %s22, 0
      %p57 = por %p55, %p56
      %p58 = scmp.ne.s32.totalorder %s44, %s45
      %p59 = scmp.eq.s32.totalorder %s23, 1
      %p60 = por %p58, %p59
      %p62 = scmp.ne.s32.totalorder %s45, %s61
      %p63 = scmp.eq.s32.totalorder %s23, 0
      %p64 = por %p62, %p63
      %s65 = ssub.s32 %s24, %s36
      %p66 = scmp.eq.s32.totalorder %s65, 0
      %s68 = sadd.s32 %s67, 1
      %s69 = scalar_select %p66, %s67, %s68
      %p72 = pneg %p66
      %p73 = scmp.eq.s32.totalorder %s17, 1
      %p74 = por %p72, %p73
      %p75 = scmp.ne.s32.totalorder %s67, %s70
      %p76 = scmp.eq.s32.totalorder %s17, 0
      %p77 = por %p75, %p76
      %p78 = scmp.ne.s32.totalorder %s67, %s70
      %p79 = scmp.eq.s32.totalorder %s22, 1
      %p80 = por %p78, %p79
      %p81 = scmp.ne.s32.totalorder %s70, %s71
      %p82 = scmp.eq.s32.totalorder %s22, 0
      %p83 = por %p81, %p82
      %p84 = scmp.ne.s32.totalorder %s70, %s71
      %p85 = scmp.eq.s32.totalorder %s23, 1
      %p86 = por %p84, %p85
      %p88 = scmp.ne.s32.totalorder %s71, %s87
      %p89 = scmp.eq.s32.totalorder %s23, 0
      %p90 = por %p88, %p89
      %s92 = sadd.s32 %s91, 1
      %p95 = scmp.eq.s32.totalorder %s17, 1
      %p96 = scmp.ne.s32.totalorder %s91, %s93
      %p97 = scmp.eq.s32.totalorder %s17, 0
      %p98 = por %p96, %p97
      %p99 = scmp.ne.s32.totalorder %s91, %s93
      %p100 = scmp.eq.s32.totalorder %s22, 1
      %p101 = por %p99, %p100
      %p102 = scmp.ne.s32.totalorder %s93, %s94
      %p103 = scmp.eq.s32.totalorder %s22, 0
      %p104 = por %p102, %p103
      %p105 = scmp.ne.s32.totalorder %s93, %s94
      %p106 = scmp.eq.s32.totalorder %s23, 1
      %p107 = por %p105, %p106
      %p109 = scmp.ne.s32.totalorder %s94, %s108
      %p110 = scmp.eq.s32.totalorder %s23, 0
      %p111 = por %p109, %p110
      %s113 = sadd.s32 %s112, 1
      %p116 = scmp.eq.s32.totalorder %s17, 1
      %p117 = scmp.ne.s32.totalorder %s112, %s114
      %p118 = scmp.eq.s32.totalorder %s17, 0
      %p119 = por %p117, %p118
      %p120 = scmp.ne.s32.totalorder %s112, %s114
      %p121 = scmp.eq.s32.totalorder %s22, 1
      %p122 = por %p120, %p121
      %p123 = scmp.ne.s32.totalorder %s114, %s115
      %p124 = scmp.eq.s32.totalorder %s22, 0
      %p125 = por %p123, %p124
      %p126 = scmp.ne.s32.totalorder %s114, %s115
      %p127 = scmp.eq.s32.totalorder %s23, 1
      %p128 = por %p126, %p127
      %p130 = scmp.ne.s32.totalorder %s115, %s129
      %p131 = scmp.eq.s32.totalorder %s23, 0
      %p132 = por %p130, %p131
      %s133 = ssub.s32 %s25, %s32
      %s134 = ssub.s32 %s24, %s36
      %s135 = sor.u32 %s133, %s134
      %p136 = scmp.eq.s32.totalorder %s135, 0
      %s138 = sadd.s32 %s137, 1
      %s139 = scalar_select %p136, %s137, %s138
      %p142 = pneg %p136
      %p143 = scmp.eq.s32.totalorder %s17, 1
      %p144 = por %p142, %p143
      %p145 = scmp.ne.s32.totalorder %s137, %s140
      %p146 = scmp.eq.s32.totalorder %s17, 0
      %p147 = por %p145, %p146
      %p148 = scmp.ne.s32.totalorder %s137, %s140
      %p149 = scmp.eq.s32.totalorder %s22, 1
      %p150 = por %p148, %p149
      %p151 = scmp.ne.s32.totalorder %s140, %s141
      %p152 = scmp.eq.s32.totalorder %s22, 0
      %p153 = por %p151, %p152
      %p154 = scmp.ne.s32.totalorder %s140, %s141
      %p155 = scmp.eq.s32.totalorder %s23, 1
      %p156 = por %p154, %p155
      %p158 = scmp.ne.s32.totalorder %s141, %s157
      %p159 = scmp.eq.s32.totalorder %s23, 0
      %p160 = por %p158, %p159
      %p161 = scmp.le.s32.totalorder 1, %s17
      %p162 = scmp.lt.s32.totalorder %s17, 3
      %p163 = pnand %p161, %p162
      %p164 = pneg %p163
      // Predicated region
      $region9: #{tpu_custom_call.1} parent=5 // pred_check
        _
      $region10: #{tpu_custom_call.1} parent=5 // pred_check_branch
        %166 = sbr.rel (%p163) target = $region12
      $region11: #{tpu_custom_call.1} parent=5 // pred_region
        %s167 = ssub.s32 %s17, 1
        // Predicated region
        $region13: #{tpu_custom_call.1} parent=11 // pred_check
          %p168 = pneg %p83
        $region14: #{tpu_custom_call.1} parent=11 // pred_check_branch
          %170 = sbr.rel (%p168) target = $region16
        $region15: #{tpu_custom_call.1} parent=11 // pred_region
          %s171 = smul.u32 2, %s26
          %173 = vsyncadd [#allocation6], 0
          %s174 = smul.addr %s171, 8
          %s175 = scalar_lea.hbm %s1, %s174
          %s176 = sshll.u32 %s175, 4
          %s177 = int_to_ptr.hbm [resolvable:$true] %s176
          %s178 = sshll.u32 [#allocation5], 4
          %s179 = int_to_ptr.vmem [resolvable:$true] %s178
          %184 = dma.hbm_to_vmem [thread:$0]  %s177, 256, %s179, [#allocation6], 128, 128, 8
        $region16: #{tpu_custom_call.1} parent=11 // pred_fallthru
          _
        // Predicated region
        $region17: #{tpu_custom_call.1} parent=11 // pred_check
          %p185 = pneg %p104
        $region18: #{tpu_custom_call.1} parent=11 // pred_check_branch
          %187 = sbr.rel (%p185) target = $region20
        $region19: #{tpu_custom_call.1} parent=11 // pred_region
          _
        $region20: #{tpu_custom_call.1} parent=11 // pred_fallthru
          _
        // Predicated region
        $region21: #{tpu_custom_call.1} parent=11 // pred_check
          %p188 = pneg %p125
        $region22: #{tpu_custom_call.1} parent=11 // pred_check_branch
          %190 = sbr.rel (%p188) target = $region24
        $region23: #{tpu_custom_call.1} parent=11 // pred_region
          _
        $region24: #{tpu_custom_call.1} parent=11 // pred_fallthru
          _
      $region12: #{tpu_custom_call.1} parent=5 // pred_fallthru
        _
      %p191 = scmp.lt.s32.totalorder %s17, 2
      // Predicated region
      $region25: #{tpu_custom_call.1} parent=5 // pred_check
        %p192 = pneg %p191
      $region26: #{tpu_custom_call.1} parent=5 // pred_check_branch
        %194 = sbr.rel (%p192) target = $region28
      $region27: #{tpu_custom_call.1} parent=5 // pred_region
        // Predicated region
        $region29: #{tpu_custom_call.1} parent=27 // pred_check
          %p195 = pneg %p51
        $region30: #{tpu_custom_call.1} parent=27 // pred_check_branch
          %197 = sbr.rel (%p195) target = $region32
        $region31: #{tpu_custom_call.1} parent=27 // pred_region
          %s198 = sand.u32 %s41, 1
          %s199 = scalar_lea.sflag [#allocation3], %s198
          %s200 = sand.u32 %s41, 1
          %s201 = smul.addr %s200, 16
          %s202 = scalar_lea.vmem [#allocation2], %s201
          %s203 = smul.u32 2, %s24
          %205 = vsyncadd %s199, 0
          %s206 = smul.addr %s25, 2
          %s207 = sadd.s32 %s203, %s206
          %s208 = smul.addr %s207, 8
          %s209 = scalar_lea.hbm %s0, %s208
          %s210 = sshll.u32 %s209, 4
          %s211 = int_to_ptr.hbm [resolvable:$true] %s210
          %s212 = sshll.u32 %s202, 4
          %s213 = int_to_ptr.vmem [resolvable:$true] %s212
          %218 = dma.hbm_to_vmem [thread:$0]  %s211, 256, %s213, %s199, 128, 128, 8
        $region32: #{tpu_custom_call.1} parent=27 // pred_fallthru
          _
      $region28: #{tpu_custom_call.1} parent=5 // pred_fallthru
        _
      %p219 = scmp.le.s32.totalorder 1, %s17
      %p220 = scmp.lt.s32.totalorder %s17, 3
      %p221 = pnand %p219, %p220
      %p222 = pneg %p221
      // Predicated region
      $region33: #{tpu_custom_call.1} parent=5 // pred_check
        _
      $region34: #{tpu_custom_call.1} parent=5 // pred_check_branch
        %224 = sbr.rel (%p221) target = $region36
      $region35: #{tpu_custom_call.1} parent=5 // pred_region
        %s225 = ssub.s32 %s17, 1
        %s226 = sand.u32 %s44, 1
        %s227 = scalar_lea.sflag [#allocation3], %s226
        %s228 = sand.u32 %s44, 1
        %s229 = smul.addr %s228, 16
        %s230 = scalar_lea.vmem [#allocation2], %s229
        // Predicated region
        $region37: #{tpu_custom_call.1} parent=35 // pred_check
          %p231 = pneg %p57
        $region38: #{tpu_custom_call.1} parent=35 // pred_check_branch
          %233 = sbr.rel (%p231) target = $region40
        $region39: #{tpu_custom_call.1} parent=35 // pred_region
          %235 = dma.done %s227, 256
        $region40: #{tpu_custom_call.1} parent=35 // pred_fallthru
          _
        // Predicated region
        $region41: #{tpu_custom_call.1} parent=35 // pred_check
          %p236 = pneg %p83
        $region42: #{tpu_custom_call.1} parent=35 // pred_check_branch
          %238 = sbr.rel (%p236) target = $region44
        $region43: #{tpu_custom_call.1} parent=35 // pred_region
          %240 = dma.done [#allocation6], 256
        $region44: #{tpu_custom_call.1} parent=35 // pred_fallthru
          _
        %s241 = sand.u32 %s44, 1
        %s242 = scalar_lea.sflag [#allocation3], %s241
        %s243 = sand.u32 %s44, 1
        %s244 = smul.addr %s243, 16
        %s245 = scalar_lea.vmem [#allocation2], %s244
        %p246 = pneg %p57
        %p247 = pneg %p54
        %p248 = pneg %p83
        %p249 = pneg %p80
        %p250 = pneg %p104
        %p251 = pneg %p101
        %p252 = pneg %p125
        %p253 = pneg %p122
        %p254 = pneg %p153
        %p255 = pneg %p150
        %s256 = sand.u32 %s140, 1
        %s257 = scalar_lea.sflag [#allocation4], %s256
        %s258 = sand.u32 %s140, 1
        %s259 = smul.addr %s258, 16
        %s260 = scalar_lea.vmem [#allocation7], %s259
        %s261 = smul.u32 2, %s26
        %s262 = smul.u32 2, %s26
        %s263 = smul.u32 2, %s26
        %v264 = vld [vmem:[%s230] sm:$0xff]
        %v265 = vld [vmem:[%s230 + $0x8] sm:$0xff]
        %v266 = vld [vmem:[#allocation5] sm:$0xff]
        %v267 = vld [vmem:[#allocation5 + $0x8] sm:$0xff]
        %v268 = vadd.f32 %v264, %v266
        %v269 = vadd.f32 %v265, %v267
        %270 = vadd.xlane.f32.xlu0 %v268
        %v271 = vpop.xlane.xlu0 %270
        %272 = vadd.xlane.f32.xlu0 %v269
        %v273 = vpop.xlane.xlu0 %272
        %v274 = vrcp.pop 128.0
        %v275 = vmul.f32 128.0, %v274
        %v276 = vsub.f32 1.0, %v275
        %v277 = vmul.f32 %v274, %v276
        %v278 = vadd.f32 %v274, %v277
        %vm279 = vweird.f32 %v274
        %v280 = vsel %vm279, %v274, %v278
        %v281 = vmul.f32 %v271, %v280
        %v282 = vmul.f32 %v273, %v280
        %v283 = vsub.f32 %v268, %v281
        %v284 = vsub.f32 %v269, %v282
        %v285 = vmul.f32 %v283, %v283
        %v286 = vmul.f32 %v284, %v284
        %287 = vadd.xlane.f32.xlu0 %v285
        %v288 = vpop.xlane.xlu0 %287
        %289 = vadd.xlane.f32.xlu0 %v286
        %v290 = vpop.xlane.xlu0 %289
        %v291 = vmul.f32 %v288, %v280
        %v292 = vmul.f32 %v290, %v280
        %v293 = vadd.f32 %v291, 1e-12
        %v294 = vadd.f32 %v292, 1e-12
        %v295 = vrsqrt.pop %v293
        %v296 = vmul.f32 %v295, %v293
        %v297 = vmul.f32 %v296, %v295
        %v298 = vmul.f32 0.5, %v297
        %v299 = vsub.f32 1.5, %v298
        %v300 = vmul.f32 %v295, %v299
        %vm301 = vweird.f32 %v293
        %vm302 = vweird.f32 %v295
        %vm303 = vmor %vm301, %vm302
        %v304 = vsel %vm303, %v295, %v300
        %v305 = vrsqrt.pop %v294
        %v306 = vmul.f32 %v305, %v294
        %v307 = vmul.f32 %v306, %v305
        %v308 = vmul.f32 0.5, %v307
        %v309 = vsub.f32 1.5, %v308
        %v310 = vmul.f32 %v305, %v309
        %vm311 = vweird.f32 %v294
        %vm312 = vweird.f32 %v305
        %vm313 = vmor %vm311, %vm312
        %v314 = vsel %vm313, %v305, %v310
        %v315 = vmul.f32 %v283, %v304
        %v316 = vmul.f32 %v284, %v314
        %v317 = vld [vmem:[%s2] sm:$0x1]
        %v319 = vperm.slane %v317, 0
        %v321 = vmul.f32 %v315, %v319
        %v322 = vmul.f32 %v316, %v319
        %v323 = vld [vmem:[%s3] sm:$0x1]
        %v325 = vperm.slane %v323, 0
        %v327 = vadd.f32 %v321, %v325
        %v328 = vadd.f32 %v322, %v325
        %329 = vst [vmem:[%s260] sm:$0xff] %v327
        %330 = vst [vmem:[%s260 + $0x8] sm:$0xff] %v328
        %s331 = sand.u32 %s140, 1
        %s332 = scalar_lea.sflag [#allocation4], %s331
        %s333 = sand.u32 %s140, 1
        %s334 = smul.addr %s333, 16
        %s335 = scalar_lea.vmem [#allocation7], %s334
        // Predicated region
        $region45: #{tpu_custom_call.1} parent=35 // pred_check
          %p336 = pneg %p150
        $region46: #{tpu_custom_call.1} parent=35 // pred_check_branch
          %338 = sbr.rel (%p336) target = $region48
        $region47: #{tpu_custom_call.1} parent=35 // pred_region
          %s339 = smul.u32 2, %s26
          %341 = vsyncadd %s332, 0
          %s342 = smul.addr %s27, 2
          %s343 = sadd.s32 %s339, %s342
          %s344 = smul.addr %s343, 8
          %s345 = scalar_lea.hbm %s4, %s344
          %s346 = sshll.u32 %s335, 4
          %s347 = int_to_ptr.vmem [resolvable:$true] %s346
          %s348 = sshll.u32 %s345, 4
          %s349 = int_to_ptr.hbm [resolvable:$true] %s348
          %354 = dma.vmem_to_hbm [thread:$0]  %s347, 256, %s349, %s332, 128, 128, 8
        $region48: #{tpu_custom_call.1} parent=35 // pred_fallthru
          _
      $region36: #{tpu_custom_call.1} parent=5 // pred_fallthru
        _
      %p355 = scmp.le.s32.totalorder 2, %s17
      // Predicated region
      $region49: #{tpu_custom_call.1} parent=5 // pred_check
        %p356 = pneg %p355
      $region50: #{tpu_custom_call.1} parent=5 // pred_check_branch
        %358 = sbr.rel (%p356) target = $region52
      $region51: #{tpu_custom_call.1} parent=5 // pred_region
        %s359 = ssub.s32 %s17, 2
        // Predicated region
        $region53: #{tpu_custom_call.1} parent=51 // pred_check
          %p360 = pneg %p156
        $region54: #{tpu_custom_call.1} parent=51 // pred_check_branch
          %362 = sbr.rel (%p360) target = $region56
        $region55: #{tpu_custom_call.1} parent=51 // pred_region
          %s363 = sand.u32 %s141, 1
          %s364 = scalar_lea.sflag [#allocation4], %s363
          %s365 = sand.u32 %s141, 1
          %s366 = smul.addr %s365, 16
          %s367 = scalar_lea.vmem [#allocation7], %s366
          %369 = dma.done %s364, 256
        $region56: #{tpu_custom_call.1} parent=51 // pred_fallthru
          _
      $region52: #{tpu_custom_call.1} parent=5 // pred_fallthru
        _
    $region6: #{tpu_custom_call.1} parent=1 // loop_footer
      %s21 = sadd.s32 1, %s17
    $region7: #{tpu_custom_call.1} parent=1 // loop_footer_branch
      %16 = sbr.rel target = $region3
    $region8: #{tpu_custom_call.1} parent=1 // loop_exit
      _
    %370 = vsyncpa [#allocation3], 1
    %s371 = scalar_lea.sflag [#allocation3], 1
    %372 = vsyncpa %s371, 1
    %373 = vsyncpa [#allocation6], 1
    %374 = vsyncpa [#allocation4], 1
    %s375 = scalar_lea.sflag [#allocation4], 1
    %376 = vsyncpa %s375, 1

</llo_original>
